<compile_context>
chip_gen: v7x
topology: tpu7x:2x2x1
jax: 0.10.0
libtpu: 0.0.40
codegen_flags: <defaults>
</compile_context>

<pallas_src>
import jax
import jax.numpy as jnp
from jax.experimental import pallas as pl
from jax.experimental.pallas import tpu as pltpu


_VMEM_LIMIT_BYTES = 48 * 1024 * 1024   # <= 64 MiB physical on v7x; safe on v5e/v6e too
_STEP_VMEM_BUDGET = 12 * 1024 * 1024   # double-buffered in+out blocks + sel matrix
_MIN_BLOCK_BYTES = 512 * 1024          # never shrink input blocks below this
_MIN_GRID_STEPS = 8                    # keep both v7x TensorCores fed on big problems


def _min_rows_for_dtype(itemsize):
    # sublane tile granularity: (8,128) f32, (16,128) bf16, (32,128) int8/fp8
    return {4: 8, 2: 16, 1: 32}.get(itemsize, 8)


def _pick_row_block(r_out, w_in, w_out, itemsize):
    """Output-row block size for the 1-D cdiv grid (partial last block is masked)."""
    min_rows = _min_rows_for_dtype(itemsize)
    if r_out <= min_rows:
        return r_out
    sel_bytes = 2 * w_in * w_out * 4                 # selection matrix (assume 2 bufs)
    per_row = 2 * (2 * w_in + w_out) * itemsize      # double-buffered in + out rows
    avail = max(_STEP_VMEM_BUDGET - sel_bytes, per_row * min_rows)
    rows = int(min(avail // per_row, r_out))
    rows = max(min_rows, (rows // min_rows) * min_rows)
    # Keep >= _MIN_GRID_STEPS steps on big problems (v7x megacore load balance),
    # but never shrink the input block below ~_MIN_BLOCK_BYTES.
    floor_rows = max(min_rows, _MIN_BLOCK_BYTES // (2 * w_in * itemsize))
    floor_rows = ((floor_rows + min_rows - 1) // min_rows) * min_rows
    while rows > floor_rows and pl.cdiv(r_out, rows) < _MIN_GRID_STEPS:
        rows = max(floor_rows, (rows // 2 // min_rows) * min_rows)
    return max(min_rows, rows)


def _pool_kernel(x_ref, sel_ref, o_ref):
    # x_ref  : (R, 2*W)  lanes [0,W) = image row 2*ho, lanes [W,2W) = image row 2*ho+1
    # sel_ref: (W, Wo)   0/1 even-column compaction matrix
    # o_ref  : (R, Wo)
    w = sel_ref.shape[0]
    top = x_ref[:, pl.ds(0, w)].astype(jnp.float32)
    bot = x_ref[:, pl.ds(w, w)].astype(jnp.float32)

    vsum = top + bot                      # vertical sum (VPU)
    vmax = jnp.maximum(top, bot)          # vertical max (VPU)

    # Lane swizzle on the (otherwise idle) XLU: shifted[:, i] = v[:, (i+1) mod w].
    ssum = pltpu.roll(vsum, w - 1, 1)
    smax = pltpu.roll(vmax, w - 1, 1)

    # Even lane 2j now holds the full 2x2 window result for output column j;
    # odd lanes hold don't-care values that the 0/1 selection matmul zeroes out.
    res = 0.25 * (vsum + ssum) + jnp.maximum(vmax, smax)   # AvgPool + MaxPool
    res = jnp.maximum(res, 0.0)                            # ReLU (commutes with 0/1 pick)

    # Single exact column-compaction matmul (even lanes -> dense Wo lanes).
    o_ref[...] = jnp.dot(
        res,
        sel_ref[...],
        precision=jax.lax.Precision.HIGHEST,
        preferred_element_type=jnp.float32,
    ).astype(o_ref.dtype)


@jax.jit
def _pool_forward(x):
    N, C, H, W = x.shape
    Ho, Wo = H // 2, W // 2
    if H % 2 or W % 2:                    # PyTorch pooling floors odd spatial dims
        x = x[:, :, : 2 * Ho, : 2 * Wo]   # rare; costs one extra HBM pass
        H, W = 2 * Ho, 2 * Wo

    r_out = N * C * Ho                    # fused output-row axis
    itemsize = jnp.dtype(x.dtype).itemsize
    rows = _pick_row_block(r_out, W, Wo, itemsize)
    grid = (pl.cdiv(r_out, rows),)

    x2 = x.reshape(r_out, 2 * W)          # free view of the NCHW buffer

    # 0/1 even-column compaction matrix (tiny, built once per shape).
    sel = (jnp.arange(W, dtype=jnp.int32)[:, None]
           == 2 * jnp.arange(Wo, dtype=jnp.int32)[None, :]).astype(jnp.float32)

    in_bytes = r_out * 2 * W * itemsize
    out_bytes = r_out * Wo * itemsize
    cost = pl.CostEstimate(
        flops=8 * r_out * W,              # VPU elementwise work; the op is HBM-bound
        transcendentals=0,
        bytes_accessed=in_bytes + out_bytes + W * Wo * 4,
    )

    out2 = pl.pallas_call(
        _pool_kernel,
        out_shape=jax.ShapeDtypeStruct((r_out, Wo), x.dtype),
        grid=grid,
        in_specs=[
            pl.BlockSpec((rows, 2 * W), lambda i: (i, 0)),    # raw image-row pairs
            pl.BlockSpec((W, Wo), lambda i: (0, 0)),          # resident selection matrix
        ],
        out_specs=pl.BlockSpec((rows, Wo), lambda i: (i, 0)),
        compiler_params=pltpu.CompilerParams(
            dimension_semantics=("parallel",),                # megacore sharding on v7x
            vmem_limit_bytes=_VMEM_LIMIT_BYTES,
        ),
        cost_estimate=cost,
    )(x2, sel)
    # NOTE: for Wo < 128 the output stores are lane-masked (most costly on v5e's
    # single vst slot); packing several output rows per lane-row would fix that
    # but is intentionally left out to keep the kernel simple and robust.
    return out2.reshape(N, C, Ho, Wo)


def pool_forward(x):
    """ReLU(AvgPool2d(2)(x) + MaxPool2d(2)(x)) for NCHW x (PyTorch `pool.forward`)."""
    if x.ndim != 4:
        raise ValueError("pool expects NCHW input")
    if x.shape[2] < 2 or x.shape[3] < 2:
        raise ValueError("pool expects H >= 2 and W >= 2")
    return _pool_forward(x)


def _reference(x):
    N, C, H, W = x.shape
    Ho, Wo = H // 2, W // 2
    xw = x[:, :, : 2 * Ho, : 2 * Wo].reshape(N, C, Ho, 2, Wo, 2)
    return jnp.maximum(xw.mean(axis=(3, 5)) + xw.max(axis=(3, 5)), 0.0)


if __name__ == "__main__":
    key = jax.random.PRNGKey(0)
    x = jax.random.normal(key, (2, 4, 16, 16), dtype=jnp.float32)

    out = jax.block_until_ready(pool_forward(x))
    ref = jax.block_until_ready(_reference(x))

    assert out.shape == (2, 4, 8, 8), out.shape
    # Precision.HIGHEST makes the 0/1 compaction matmul exact; loose tolerance kept
    # only as headroom for VPU summation-order differences.
    assert jnp.allclose(out, ref, atol=1e-4, rtol=1e-4), float(
        jnp.max(jnp.abs(out - ref))
    )
    print("KERNEL_OK")
</pallas_src>

<mosaic_0001>
module attributes {stable_mosaic.version = 11 : i64} {
  func.func @_pool_kernel(%arg0: i32, %arg1: memref<64x32xf32, #tpu.memory_space<vmem>>, %arg2: memref<16x8xf32, #tpu.memory_space<vmem>>, %arg3: memref<64x8xf32, #tpu.memory_space<vmem>>) attributes {dimension_semantics = [#tpu.dimension_semantics<parallel>], iteration_bounds = array<i64: 1>, scalar_prefetch = 0 : i64, scratch_operands = 0 : i64, tpu.core_type = #tpu.core_type<tc>, window_params = [{transform_indices = @transform_0, window_bounds = array<i64: 64, 32>}, {pipeline_mode = #tpu.pipeline_mode<synchronous>, transform_indices = @transform_1, window_bounds = array<i64: 16, 8>}, {transform_indices = @transform_2, window_bounds = array<i64: 64, 8>}]} {
    %c0 = arith.constant 0 : index
    %c0_0 = arith.constant 0 : index
    %0 = vector.load %arg1[%c0, %c0_0] : memref<64x32xf32, #tpu.memory_space<vmem>>, vector<64x16xf32>
    %c0_1 = arith.constant 0 : index
    %c16 = arith.constant 16 : index
    %1 = vector.load %arg1[%c0_1, %c16] : memref<64x32xf32, #tpu.memory_space<vmem>>, vector<64x16xf32>
    %2 = arith.addf %0, %1 : vector<64x16xf32>
    %3 = arith.maximumf %0, %1 : vector<64x16xf32>
    %c15_i32 = arith.constant 15 : i32
    %4 = tpu.dynamic_rotate %2 by %c15_i32 dim 1 : vector<64x16xf32>, i32 -> vector<64x16xf32>
    %c15_i32_2 = arith.constant 15 : i32
    %5 = tpu.dynamic_rotate %3 by %c15_i32_2 dim 1 : vector<64x16xf32>, i32 -> vector<64x16xf32>
    %6 = arith.addf %2, %4 : vector<64x16xf32>
    %cst = arith.constant 2.500000e-01 : f32
    %7 = vector.broadcast %cst : f32 to vector<64x16xf32>
    %8 = arith.mulf %7, %6 : vector<64x16xf32>
    %9 = arith.maximumf %3, %5 : vector<64x16xf32>
    %10 = arith.addf %8, %9 : vector<64x16xf32>
    %cst_3 = arith.constant 0.000000e+00 : f32
    %11 = vector.broadcast %cst_3 : f32 to vector<64x16xf32>
    %12 = arith.maximumf %10, %11 : vector<64x16xf32>
    %c0_4 = arith.constant 0 : index
    %c0_5 = arith.constant 0 : index
    %13 = vector.load %arg2[%c0_4, %c0_5] : memref<16x8xf32, #tpu.memory_space<vmem>>, vector<16x8xf32>
    %cst_6 = arith.constant dense<0.000000e+00> : vector<64x8xf32>
    %14 = tpu.matmul %12, %13, %cst_6 {dimension_numbers = #tpu.dot_dimension_numbers<[1], [0], [0], [1], [0, 0, 1, 1], [], []>, precision = #tpu.contract_precision<fp32>} : vector<64x16xf32>, vector<16x8xf32>, vector<64x8xf32> -> vector<64x8xf32>
    %c0_7 = arith.constant 0 : index
    %c0_8 = arith.constant 0 : index
    %15 = vector.load %arg3[%c0_7, %c0_8] : memref<64x8xf32, #tpu.memory_space<vmem>>, vector<64x8xf32>
    tpu.vector_store %arg3[%c0_7, %c0_8], %14 {strides = array<i32>} : memref<64x8xf32, #tpu.memory_space<vmem>>, vector<64x8xf32>,
    return
  }
  func.func @transform_0(%arg0: i32) -> (i32, i32) {
    %c0_i32 = arith.constant 0 : i32
    %c0_i32_0 = arith.constant 0 : i32
    return %arg0, %c0_i32 : i32, i32
  }
  func.func @transform_1(%arg0: i32) -> (i32, i32) {
    %c0_i32 = arith.constant 0 : i32
    %c0_i32_0 = arith.constant 0 : i32
    %c0_i32_1 = arith.constant 0 : i32
    return %c0_i32, %c0_i32_0 : i32, i32
  }
  func.func @transform_2(%arg0: i32) -> (i32, i32) {
    %c0_i32 = arith.constant 0 : i32
    %c0_i32_0 = arith.constant 0 : i32
    return %arg0, %c0_i32 : i32, i32
  }
}

</mosaic_0001>

<llo_original>
// kernel: _pool_forward.1
$region0: #{_pool_forward.1}
  #allocation0 [shape = 'u32[]', space=smem, size = 0x4, offset = 0x4, fixed_abs, tag = 'smem constant byte address 0x4 - core index']
  #allocation1 [shape = 'u32[144,128]{1,0:T(1,128)}', space=vmem, size = 0x12000, scoped, tag = 'internal scratch']
  %s0 = inlined_call_operand.vmem [shape: f32[64,32], index: 0, kind: input, shape index: {}]
  %s1 = inlined_call_operand.vmem [shape: f32[16,8], index: 1, kind: input, shape index: {}]
  %s2 = inlined_call_operand.hbm [shape: f32[64,8], index: 2, kind: output, shape index: {}]
  %s3 = sld [smem:[#allocation0]]
  $region18: #{_pool_forward.1} parent=0
    _
  %s5 = ssub.s32 1, %s3
  %s6 = scalar_select 0, %s5, %s3
  $region1: #{_pool_forward.1} parent=0
    #allocation2 [shape = 'u8[32768]{0}', space=vmem, size = 0x8000, scoped, tag = 'output window, operand 0, single buffered']
    #allocation3 [shape = 's32[1]{0}', space=sflag, size = 0x4, scoped, tag = 'scoped memory for _pool_forward.1']
    %7 = vsyncpa [#allocation3], 0
    // Predicated region
    $region2: #{_pool_forward.1} parent=1 // pred_check
      _
    $region3: #{_pool_forward.1} parent=1 // pred_check_branch
      %9 = sbr.rel (0) target = $region5
    $region4: #{_pool_forward.1} parent=1 // pred_region
      _
    $region5: #{_pool_forward.1} parent=1 // pred_fallthru
      _
    // Predicated region
    $region6: #{_pool_forward.1} parent=1 // pred_check
      _
    $region7: #{_pool_forward.1} parent=1 // pred_check_branch
      %11 = sbr.rel (0) target = $region9
    $region8: #{_pool_forward.1} parent=1 // pred_region
      _
    $region9: #{_pool_forward.1} parent=1 // pred_fallthru
      _
    %v12 = vld [vmem:[%s0] sm:$0xff]
    %v13 = vld [vmem:[%s0 + $0x8] sm:$0xff]
    %v14 = vld [vmem:[%s0 + $0x10] sm:$0xff]
    %v15 = vld [vmem:[%s0 + $0x18] sm:$0xff]
    %v16 = vld [vmem:[%s0 + $0x20] sm:$0xff]
    %v17 = vld [vmem:[%s0 + $0x28] sm:$0xff]
    %v18 = vld [vmem:[%s0 + $0x30] sm:$0xff]
    %v19 = vld [vmem:[%s0 + $0x38] sm:$0xff]
    %28 = vrot.lane.b32.xlu0 %v12, 112
    %v29 = vpop.permute.xlu0 %28
    %30 = vrot.lane.b32.xlu0 %v13, 112
    %v31 = vpop.permute.xlu0 %30
    %32 = vrot.lane.b32.xlu0 %v14, 112
    %v33 = vpop.permute.xlu0 %32
    %34 = vrot.lane.b32.xlu0 %v15, 112
    %v35 = vpop.permute.xlu0 %34
    %36 = vrot.lane.b32.xlu0 %v16, 112
    %v37 = vpop.permute.xlu0 %36
    %38 = vrot.lane.b32.xlu0 %v17, 112
    %v39 = vpop.permute.xlu0 %38
    %40 = vrot.lane.b32.xlu0 %v18, 112
    %v41 = vpop.permute.xlu0 %40
    %42 = vrot.lane.b32.xlu0 %v19, 112
    %v43 = vpop.permute.xlu0 %42
    %v52 = vadd.f32 %v12, %v29
    %v53 = vadd.f32 %v13, %v31
    %v54 = vadd.f32 %v14, %v33
    %v55 = vadd.f32 %v15, %v35
    %v56 = vadd.f32 %v16, %v37
    %v57 = vadd.f32 %v17, %v39
    %v58 = vadd.f32 %v18, %v41
    %v59 = vadd.f32 %v19, %v43
    %v60 = vmax.f32 %v12, %v29
    %v61 = vmax.f32 %v13, %v31
    %v62 = vmax.f32 %v14, %v33
    %v63 = vmax.f32 %v15, %v35
    %v64 = vmax.f32 %v16, %v37
    %v65 = vmax.f32 %v17, %v39
    %v66 = vmax.f32 %v18, %v41
    %v67 = vmax.f32 %v19, %v43
    %vm68 = vcmask 1047680
    %69 = vrot.lane.b32.xlu0 %v52, 16
    %v70 = vpop.permute.xlu0 %69
    %v71 = vsel %vm68, %v70, %v52
    %72 = vrot.lane.b32.xlu0 %v53, 16
    %v73 = vpop.permute.xlu0 %72
    %v74 = vsel %vm68, %v73, %v53
    %75 = vrot.lane.b32.xlu0 %v54, 16
    %v76 = vpop.permute.xlu0 %75
    %v77 = vsel %vm68, %v76, %v54
    %78 = vrot.lane.b32.xlu0 %v55, 16
    %v79 = vpop.permute.xlu0 %78
    %v80 = vsel %vm68, %v79, %v55
    %81 = vrot.lane.b32.xlu0 %v56, 16
    %v82 = vpop.permute.xlu0 %81
    %v83 = vsel %vm68, %v82, %v56
    %84 = vrot.lane.b32.xlu0 %v57, 16
    %v85 = vpop.permute.xlu0 %84
    %v86 = vsel %vm68, %v85, %v57
    %87 = vrot.lane.b32.xlu0 %v58, 16
    %v88 = vpop.permute.xlu0 %87
    %v89 = vsel %vm68, %v88, %v58
    %90 = vrot.lane.b32.xlu0 %v59, 16
    %v91 = vpop.permute.xlu0 %90
    %v92 = vsel %vm68, %v91, %v59
    %93 = vrot.lane.b32.xlu0 %v71, 16
    %v94 = vpop.permute.xlu0 %93
    %95 = vrot.lane.b32.xlu0 %v74, 16
    %v96 = vpop.permute.xlu0 %95
    %97 = vrot.lane.b32.xlu0 %v77, 16
    %v98 = vpop.permute.xlu0 %97
    %99 = vrot.lane.b32.xlu0 %v80, 16
    %v100 = vpop.permute.xlu0 %99
    %101 = vrot.lane.b32.xlu0 %v83, 16
    %v102 = vpop.permute.xlu0 %101
    %103 = vrot.lane.b32.xlu0 %v86, 16
    %v104 = vpop.permute.xlu0 %103
    %105 = vrot.lane.b32.xlu0 %v89, 16
    %v106 = vpop.permute.xlu0 %105
    %107 = vrot.lane.b32.xlu0 %v92, 16
    %v108 = vpop.permute.xlu0 %107
    %v109 = vsel %vm68, %v94, %v52
    %v110 = vsel %vm68, %v96, %v53
    %v111 = vsel %vm68, %v98, %v54
    %v112 = vsel %vm68, %v100, %v55
    %v113 = vsel %vm68, %v102, %v56
    %v114 = vsel %vm68, %v104, %v57
    %v115 = vsel %vm68, %v106, %v58
    %v116 = vsel %vm68, %v108, %v59
    %117 = vrot.lane.b32.xlu0 %v60, 16
    %v118 = vpop.permute.xlu0 %117
    %v119 = vsel %vm68, %v118, %v60
    %120 = vrot.lane.b32.xlu0 %v61, 16
    %v121 = vpop.permute.xlu0 %120
    %v122 = vsel %vm68, %v121, %v61
    %123 = vrot.lane.b32.xlu0 %v62, 16
    %v124 = vpop.permute.xlu0 %123
    %v125 = vsel %vm68, %v124, %v62
    %126 = vrot.lane.b32.xlu0 %v63, 16
    %v127 = vpop.permute.xlu0 %126
    %v128 = vsel %vm68, %v127, %v63
    %129 = vrot.lane.b32.xlu0 %v64, 16
    %v130 = vpop.permute.xlu0 %129
    %v131 = vsel %vm68, %v130, %v64
    %132 = vrot.lane.b32.xlu0 %v65, 16
    %v133 = vpop.permute.xlu0 %132
    %v134 = vsel %vm68, %v133, %v65
    %135 = vrot.lane.b32.xlu0 %v66, 16
    %v136 = vpop.permute.xlu0 %135
    %v137 = vsel %vm68, %v136, %v66
    %138 = vrot.lane.b32.xlu0 %v67, 16
    %v139 = vpop.permute.xlu0 %138
    %v140 = vsel %vm68, %v139, %v67
    %141 = vrot.lane.b32.xlu0 %v119, 16
    %v142 = vpop.permute.xlu0 %141
    %143 = vrot.lane.b32.xlu0 %v122, 16
    %v144 = vpop.permute.xlu0 %143
    %145 = vrot.lane.b32.xlu0 %v125, 16
    %v146 = vpop.permute.xlu0 %145
    %147 = vrot.lane.b32.xlu0 %v128, 16
    %v148 = vpop.permute.xlu0 %147
    %149 = vrot.lane.b32.xlu0 %v131, 16
    %v150 = vpop.permute.xlu0 %149
    %151 = vrot.lane.b32.xlu0 %v134, 16
    %v152 = vpop.permute.xlu0 %151
    %153 = vrot.lane.b32.xlu0 %v137, 16
    %v154 = vpop.permute.xlu0 %153
    %155 = vrot.lane.b32.xlu0 %v140, 16
    %v156 = vpop.permute.xlu0 %155
    %v157 = vsel %vm68, %v142, %v60
    %v158 = vsel %vm68, %v144, %v61
    %v159 = vsel %vm68, %v146, %v62
    %v160 = vsel %vm68, %v148, %v63
    %v161 = vsel %vm68, %v150, %v64
    %v162 = vsel %vm68, %v152, %v65
    %v163 = vsel %vm68, %v154, %v66
    %v164 = vsel %vm68, %v156, %v67
    %173 = vrot.lane.b32.xlu0 %v109, 127
    %v174 = vpop.permute.xlu0 %173
    %175 = vrot.lane.b32.xlu0 %v110, 127
    %v176 = vpop.permute.xlu0 %175
    %177 = vrot.lane.b32.xlu0 %v111, 127
    %v178 = vpop.permute.xlu0 %177
    %179 = vrot.lane.b32.xlu0 %v112, 127
    %v180 = vpop.permute.xlu0 %179
    %181 = vrot.lane.b32.xlu0 %v113, 127
    %v182 = vpop.permute.xlu0 %181
    %183 = vrot.lane.b32.xlu0 %v114, 127
    %v184 = vpop.permute.xlu0 %183
    %185 = vrot.lane.b32.xlu0 %v115, 127
    %v186 = vpop.permute.xlu0 %185
    %187 = vrot.lane.b32.xlu0 %v116, 127
    %v188 = vpop.permute.xlu0 %187
    %v197 = vadd.f32 %v52, %v174
    %v198 = vadd.f32 %v53, %v176
    %v199 = vadd.f32 %v54, %v178
    %v200 = vadd.f32 %v55, %v180
    %v201 = vadd.f32 %v56, %v182
    %v202 = vadd.f32 %v57, %v184
    %v203 = vadd.f32 %v58, %v186
    %v204 = vadd.f32 %v59, %v188
    %v205 = vmul.f32 %v197, 0.25
    %v206 = vmul.f32 %v198, 0.25
    %v207 = vmul.f32 %v199, 0.25
    %v208 = vmul.f32 %v200, 0.25
    %v209 = vmul.f32 %v201, 0.25
    %v210 = vmul.f32 %v202, 0.25
    %v211 = vmul.f32 %v203, 0.25
    %v212 = vmul.f32 %v204, 0.25
    %221 = vrot.lane.b32.xlu0 %v157, 127
    %v222 = vpop.permute.xlu0 %221
    %223 = vrot.lane.b32.xlu0 %v158, 127
    %v224 = vpop.permute.xlu0 %223
    %225 = vrot.lane.b32.xlu0 %v159, 127
    %v226 = vpop.permute.xlu0 %225
    %227 = vrot.lane.b32.xlu0 %v160, 127
    %v228 = vpop.permute.xlu0 %227
    %229 = vrot.lane.b32.xlu0 %v161, 127
    %v230 = vpop.permute.xlu0 %229
    %231 = vrot.lane.b32.xlu0 %v162, 127
    %v232 = vpop.permute.xlu0 %231
    %233 = vrot.lane.b32.xlu0 %v163, 127
    %v234 = vpop.permute.xlu0 %233
    %235 = vrot.lane.b32.xlu0 %v164, 127
    %v236 = vpop.permute.xlu0 %235
    %v245 = vmax.f32 %v60, %v222
    %v246 = vmax.f32 %v61, %v224
    %v247 = vmax.f32 %v62, %v226
    %v248 = vmax.f32 %v63, %v228
    %v249 = vmax.f32 %v64, %v230
    %v250 = vmax.f32 %v65, %v232
    %v251 = vmax.f32 %v66, %v234
    %v252 = vmax.f32 %v67, %v236
    %v253 = vadd.f32 %v205, %v245
    %v254 = vadd.f32 %v206, %v246
    %v255 = vadd.f32 %v207, %v247
    %v256 = vadd.f32 %v208, %v248
    %v257 = vadd.f32 %v209, %v249
    %v258 = vadd.f32 %v210, %v250
    %v259 = vadd.f32 %v211, %v251
    %v260 = vadd.f32 %v212, %v252
    %v261 = vmax.f32 %v253, 0.0
    %v262 = vmax.f32 %v254, 0.0
    %v263 = vmax.f32 %v255, 0.0
    %v264 = vmax.f32 %v256, 0.0
    %v265 = vmax.f32 %v257, 0.0
    %v266 = vmax.f32 %v258, 0.0
    %v267 = vmax.f32 %v259, 0.0
    %v268 = vmax.f32 %v260, 0.0
    %v269 = vld [vmem:[%s1] sm:$0xff]
    %v270 = vld [vmem:[%s1 + $0x8] sm:$0xff]
    %vm271 = vcmask 130048
    %v273 = vsel %vm271, %v261, 0
    %v276 = vsel %vm271, %v262, 0
    %v279 = vsel %vm271, %v263, 0
    %v282 = vsel %vm271, %v264, 0
    %v285 = vsel %vm271, %v265, 0
    %v288 = vsel %vm271, %v266, 0
    %v291 = vsel %vm271, %v267, 0
    %v294 = vsel %vm271, %v268, 0
    %296 = vmatprep.subr.mxu0 0.0
    %v297 = vand.u32 %v269, 4294901760
    %298 = vmatpush1.msra.mxu0 %v297
    %299 = vmatprep.subr.mxu0 0.0
    %v300 = vand.u32 %v270, 4294901760
    %301 = vmatpush1.msra.mxu0 %v300
    %302 = vmatprep.subr.mxu0 0.0
    %303 = vmatpush1.msra.mxu0 0.0
    %304 = vmatprep.subr.mxu0 0.0
    %305 = vmatpush1.msra.mxu0 0.0
    %306 = vmatprep.subr.mxu0 0.0
    %307 = vmatpush1.msra.mxu0 0.0
    %308 = vmatprep.subr.mxu0 0.0
    %309 = vmatpush1.msra.mxu0 0.0
    %310 = vmatprep.subr.mxu0 0.0
    %311 = vmatpush1.msra.mxu0 0.0
    %312 = vmatprep.subr.mxu0 0.0
    %313 = vmatpush1.msra.mxu0 0.0
    %314 = vmatprep.subr.mxu0 0.0
    %315 = vmatpush1.msra.mxu0 0.0
    %316 = vmatprep.subr.mxu0 0.0
    %317 = vmatpush1.msra.mxu0 0.0
    %318 = vmatprep.subr.mxu0 0.0
    %319 = vmatpush1.msra.mxu0 0.0
    %320 = vmatprep.subr.mxu0 0.0
    %321 = vmatpush1.msra.mxu0 0.0
    %322 = vmatprep.subr.mxu0 0.0
    %323 = vmatpush1.msra.mxu0 0.0
    %324 = vmatprep.subr.mxu0 0.0
    %325 = vmatpush1.msra.mxu0 0.0
    %326 = vmatprep.subr.mxu0 0.0
    %327 = vmatpush1.msra.mxu0 0.0
    %328 = vmatprep.subr.mxu0 0.0
    %329 = vmatpush1.msra.mxu0 0.0
    %330 = vmatprep.subr.mxu0 0.0
    %331 = vmatpush1.msra.mxu0 0.0
    %332 = vmatprep.subr.mxu0 0.0
    %333 = vmatpush1.msra.mxu0 0.0
    %334 = vmatprep.subr.mxu0 0.0
    %335 = vmatpush1.msra.mxu0 0.0
    %336 = vmatprep.subr.mxu0 0.0
    %337 = vmatpush1.msra.mxu0 0.0
    %338 = vmatprep.subr.mxu0 0.0
    %339 = vmatpush1.msra.mxu0 0.0
    %340 = vmatprep.subr.mxu0 0.0
    %341 = vmatpush1.msra.mxu0 0.0
    %342 = vmatprep.subr.mxu0 0.0
    %343 = vmatpush1.msra.mxu0 0.0
    %344 = vmatprep.subr.mxu0 0.0
    %345 = vmatpush1.msra.mxu0 0.0
    %346 = vmatprep.subr.mxu0 0.0
    %347 = vmatpush1.msra.mxu0 0.0
    %348 = vmatprep.subr.mxu0 0.0
    %349 = vmatpush1.msra.mxu0 0.0
    %350 = vmatprep.subr.mxu0 0.0
    %351 = vmatpush1.msra.mxu0 0.0
    %352 = vmatprep.subr.mxu0 0.0
    %353 = vmatpush1.msra.mxu0 0.0
    %354 = vmatprep.subr.mxu0 0.0
    %355 = vmatpush1.msra.mxu0 0.0
    %356 = vmatprep.subr.mxu0 0.0
    %357 = vmatpush1.msra.mxu0 0.0
    %358 = vmatprep.subr.mxu0 0.0
    %359 = vmatpush1.msra.mxu0 0.0
    %360 = vmatprep.subr.mxu0 0.0
    %361 = vmatpush1.msra.mxu0 0.0
    %362 = vmatprep.mubr.f32.mxu0 0.0
    %v363 = vand.u32 %v273, 4294901760
    %v364 = vsub.f32 %v273, %v363
    %v365 = vand.u32 %v364, 4294901760
    %v366 = vsub.f32 %v364, %v365
    %v367 = vand.u32 %v366, 4294901760
    %368 = vmatmul.mubr.f32.gmra.mrb[0].mxu0 %v367
    %v369 = vpop.f32.mrb[0].mxu0
    %v370 = vadd.f32 0.0, %v369
    %v371 = vpop.f32.mrb[0].mxu0
    %372 = vmatprep.mubr.f32.mxu0 0.0
    %v373 = vand.u32 %v276, 4294901760
    %v374 = vsub.f32 %v276, %v373
    %v375 = vand.u32 %v374, 4294901760
    %v376 = vsub.f32 %v374, %v375
    %v377 = vand.u32 %v376, 4294901760
    %378 = vmatmul.mubr.f32.gmra.mrb[0].mxu0 %v377
    %v379 = vpop.f32.mrb[0].mxu0
    %v380 = vadd.f32 0.0, %v379
    %v381 = vpop.f32.mrb[0].mxu0
    %382 = vmatprep.mubr.f32.mxu0 0.0
    %v383 = vand.u32 %v279, 4294901760
    %v384 = vsub.f32 %v279, %v383
    %v385 = vand.u32 %v384, 4294901760
    %v386 = vsub.f32 %v384, %v385
    %v387 = vand.u32 %v386, 4294901760
    %388 = vmatmul.mubr.f32.gmra.mrb[0].mxu0 %v387
    %v389 = vpop.f32.mrb[0].mxu0
    %v390 = vadd.f32 0.0, %v389
    %v391 = vpop.f32.mrb[0].mxu0
    %392 = vmatprep.mubr.f32.mxu0 0.0
    %v393 = vand.u32 %v282, 4294901760
    %v394 = vsub.f32 %v282, %v393
    %v395 = vand.u32 %v394, 4294901760
    %v396 = vsub.f32 %v394, %v395
    %v397 = vand.u32 %v396, 4294901760
    %398 = vmatmul.mubr.f32.gmra.mrb[0].mxu0 %v397
    %v399 = vpop.f32.mrb[0].mxu0
    %v400 = vadd.f32 0.0, %v399
    %v401 = vpop.f32.mrb[0].mxu0
    %402 = vmatprep.mubr.f32.mxu0 0.0
    %v403 = vand.u32 %v285, 4294901760
    %v404 = vsub.f32 %v285, %v403
    %v405 = vand.u32 %v404, 4294901760
    %v406 = vsub.f32 %v404, %v405
    %v407 = vand.u32 %v406, 4294901760
    %408 = vmatmul.mubr.f32.gmra.mrb[0].mxu0 %v407
    %v409 = vpop.f32.mrb[0].mxu0
    %v410 = vadd.f32 0.0, %v409
    %v411 = vpop.f32.mrb[0].mxu0
    %412 = vmatprep.mubr.f32.mxu0 0.0
    %v413 = vand.u32 %v288, 4294901760
    %v414 = vsub.f32 %v288, %v413
    %v415 = vand.u32 %v414, 4294901760
    %v416 = vsub.f32 %v414, %v415
    %v417 = vand.u32 %v416, 4294901760
    %418 = vmatmul.mubr.f32.gmra.mrb[0].mxu0 %v417
    %v419 = vpop.f32.mrb[0].mxu0
    %v420 = vadd.f32 0.0, %v419
    %v421 = vpop.f32.mrb[0].mxu0
    %422 = vmatprep.mubr.f32.mxu0 0.0
    %v423 = vand.u32 %v291, 4294901760
    %v424 = vsub.f32 %v291, %v423
    %v425 = vand.u32 %v424, 4294901760
    %v426 = vsub.f32 %v424, %v425
    %v427 = vand.u32 %v426, 4294901760
    %428 = vmatmul.mubr.f32.gmra.mrb[0].mxu0 %v427
    %v429 = vpop.f32.mrb[0].mxu0
    %v430 = vadd.f32 0.0, %v429
    %v431 = vpop.f32.mrb[0].mxu0
    %432 = vmatprep.mubr.f32.mxu0 0.0
    %v433 = vand.u32 %v294, 4294901760
    %v434 = vsub.f32 %v294, %v433
    %v435 = vand.u32 %v434, 4294901760
    %v436 = vsub.f32 %v434, %v435
    %v437 = vand.u32 %v436, 4294901760
    %438 = vmatmul.mubr.f32.gmra.mrb[0].mxu0 %v437
    %v439 = vpop.f32.mrb[0].mxu0
    %v440 = vadd.f32 0.0, %v439
    %v441 = vpop.f32.mrb[0].mxu0
    %442 = vdwg.mxu0
    %443 = vmatprep.subr.mxu0 0.0
    %v444 = vand.u32 %v269, 4294901760
    %v445 = vsub.f32 %v269, %v444
    %v446 = vand.u32 %v445, 4294901760
    %v447 = vsub.f32 %v445, %v446
    %v448 = vand.u32 %v447, 4294901760
    %449 = vmatpush1.msra.mxu0 %v448
    %450 = vmatprep.subr.mxu0 0.0
    %v451 = vand.u32 %v270, 4294901760
    %v452 = vsub.f32 %v270, %v451
    %v453 = vand.u32 %v452, 4294901760
    %v454 = vsub.f32 %v452, %v453
    %v455 = vand.u32 %v454, 4294901760
    %456 = vmatpush1.msra.mxu0 %v455
    %457 = vmatprep.subr.mxu0 0.0
    %458 = vmatpush1.msra.mxu0 0.0
    %459 = vmatprep.subr.mxu0 0.0
    %460 = vmatpush1.msra.mxu0 0.0
    %461 = vmatprep.subr.mxu0 0.0
    %462 = vmatpush1.msra.mxu0 0.0
    %463 = vmatprep.subr.mxu0 0.0
    %464 = vmatpush1.msra.mxu0 0.0
    %465 = vmatprep.subr.mxu0 0.0
    %466 = vmatpush1.msra.mxu0 0.0
    %467 = vmatprep.subr.mxu0 0.0
    %468 = vmatpush1.msra.mxu0 0.0
    %469 = vmatprep.subr.mxu0 0.0
    %470 = vmatpush1.msra.mxu0 0.0
    %471 = vmatprep.subr.mxu0 0.0
    %472 = vmatpush1.msra.mxu0 0.0
    %473 = vmatprep.subr.mxu0 0.0
    %474 = vmatpush1.msra.mxu0 0.0
    %475 = vmatprep.subr.mxu0 0.0
    %476 = vmatpush1.msra.mxu0 0.0
    %477 = vmatprep.subr.mxu0 0.0
    %478 = vmatpush1.msra.mxu0 0.0
    %479 = vmatprep.subr.mxu0 0.0
    %480 = vmatpush1.msra.mxu0 0.0
    %481 = vmatprep.subr.mxu0 0.0
    %482 = vmatpush1.msra.mxu0 0.0
    %483 = vmatprep.subr.mxu0 0.0
    %484 = vmatpush1.msra.mxu0 0.0
    %485 = vmatprep.subr.mxu0 0.0
    %486 = vmatpush1.msra.mxu0 0.0
    %487 = vmatprep.subr.mxu0 0.0
    %488 = vmatpush1.msra.mxu0 0.0
    %489 = vmatprep.subr.mxu0 0.0
    %490 = vmatpush1.msra.mxu0 0.0
    %491 = vmatprep.subr.mxu0 0.0
    %492 = vmatpush1.msra.mxu0 0.0
    %493 = vmatprep.subr.mxu0 0.0
    %494 = vmatpush1.msra.mxu0 0.0
    %495 = vmatprep.subr.mxu0 0.0
    %496 = vmatpush1.msra.mxu0 0.0
    %497 = vmatprep.subr.mxu0 0.0
    %498 = vmatpush1.msra.mxu0 0.0
    %499 = vmatprep.subr.mxu0 0.0
    %500 = vmatpush1.msra.mxu0 0.0
    %501 = vmatprep.subr.mxu0 0.0
    %502 = vmatpush1.msra.mxu0 0.0
    %503 = vmatprep.subr.mxu0 0.0
    %504 = vmatpush1.msra.mxu0 0.0
    %505 = vmatprep.subr.mxu0 0.0
    %506 = vmatpush1.msra.mxu0 0.0
    %507 = vmatprep.subr.mxu0 0.0
    %508 = vmatpush1.msra.mxu0 0.0
    %509 = vmatprep.subr.mxu0 0.0
    %510 = vmatpush1.msra.mxu0 0.0
    %511 = vmatprep.subr.mxu0 0.0
    %512 = vmatpush1.msra.mxu0 0.0
    %513 = vmatprep.subr.mxu0 0.0
    %514 = vmatpush1.msra.mxu0 0.0
    %515 = vmatprep.subr.mxu0 0.0
    %516 = vmatpush1.msra.mxu0 0.0
    %517 = vmatprep.mubr.f32.mxu0 0.0
    %v518 = vand.u32 %v273, 4294901760
    %519 = vmatmul.mubr.f32.gmra.mrb[0].mxu0 %v518
    %v520 = vpop.f32.mrb[0].mxu0
    %v521 = vadd.f32 %v370, %v520
    %v522 = vpop.f32.mrb[0].mxu0
    %523 = vmatprep.mubr.f32.mxu0 0.0
    %v524 = vand.u32 %v276, 4294901760
    %525 = vmatmul.mubr.f32.gmra.mrb[0].mxu0 %v524
    %v526 = vpop.f32.mrb[0].mxu0
    %v527 = vadd.f32 %v380, %v526
    %v528 = vpop.f32.mrb[0].mxu0
    %529 = vmatprep.mubr.f32.mxu0 0.0
    %v530 = vand.u32 %v279, 4294901760
    %531 = vmatmul.mubr.f32.gmra.mrb[0].mxu0 %v530
    %v532 = vpop.f32.mrb[0].mxu0
    %v533 = vadd.f32 %v390, %v532
    %v534 = vpop.f32.mrb[0].mxu0
    %535 = vmatprep.mubr.f32.mxu0 0.0
    %v536 = vand.u32 %v282, 4294901760
    %537 = vmatmul.mubr.f32.gmra.mrb[0].mxu0 %v536
    %v538 = vpop.f32.mrb[0].mxu0
    %v539 = vadd.f32 %v400, %v538
    %v540 = vpop.f32.mrb[0].mxu0
    %541 = vmatprep.mubr.f32.mxu0 0.0
    %v542 = vand.u32 %v285, 4294901760
    %543 = vmatmul.mubr.f32.gmra.mrb[0].mxu0 %v542
    %v544 = vpop.f32.mrb[0].mxu0
    %v545 = vadd.f32 %v410, %v544
    %v546 = vpop.f32.mrb[0].mxu0
    %547 = vmatprep.mubr.f32.mxu0 0.0
    %v548 = vand.u32 %v288, 4294901760
    %549 = vmatmul.mubr.f32.gmra.mrb[0].mxu0 %v548
    %v550 = vpop.f32.mrb[0].mxu0
    %v551 = vadd.f32 %v420, %v550
    %v552 = vpop.f32.mrb[0].mxu0
    %553 = vmatprep.mubr.f32.mxu0 0.0
    %v554 = vand.u32 %v291, 4294901760
    %555 = vmatmul.mubr.f32.gmra.mrb[0].mxu0 %v554
    %v556 = vpop.f32.mrb[0].mxu0
    %v557 = vadd.f32 %v430, %v556
    %v558 = vpop.f32.mrb[0].mxu0
    %559 = vmatprep.mubr.f32.mxu0 0.0
    %v560 = vand.u32 %v294, 4294901760
    %561 = vmatmul.mubr.f32.gmra.mrb[0].mxu0 %v560
    %v562 = vpop.f32.mrb[0].mxu0
    %v563 = vadd.f32 %v440, %v562
    %v564 = vpop.f32.mrb[0].mxu0
    %565 = vdwg.mxu0
    %566 = vmatprep.subr.mxu0 0.0
    %v567 = vand.u32 %v269, 4294901760
    %v568 = vsub.f32 %v269, %v567
    %569 = vmatpush1.msra.mxu0 %v568
    %570 = vmatprep.subr.mxu0 0.0
    %v571 = vand.u32 %v270, 4294901760
    %v572 = vsub.f32 %v270, %v571
    %573 = vmatpush1.msra.mxu0 %v572
    %574 = vmatprep.subr.mxu0 0.0
    %575 = vmatpush1.msra.mxu0 0.0
    %576 = vmatprep.subr.mxu0 0.0
    %577 = vmatpush1.msra.mxu0 0.0
    %578 = vmatprep.subr.mxu0 0.0
    %579 = vmatpush1.msra.mxu0 0.0
    %580 = vmatprep.subr.mxu0 0.0
    %581 = vmatpush1.msra.mxu0 0.0
    %582 = vmatprep.subr.mxu0 0.0
    %583 = vmatpush1.msra.mxu0 0.0
    %584 = vmatprep.subr.mxu0 0.0
    %585 = vmatpush1.msra.mxu0 0.0
    %586 = vmatprep.subr.mxu0 0.0
    %587 = vmatpush1.msra.mxu0 0.0
    %588 = vmatprep.subr.mxu0 0.0
    %589 = vmatpush1.msra.mxu0 0.0
    %590 = vmatprep.subr.mxu0 0.0
    %591 = vmatpush1.msra.mxu0 0.0
    %592 = vmatprep.subr.mxu0 0.0
    %593 = vmatpush1.msra.mxu0 0.0
    %594 = vmatprep.subr.mxu0 0.0
    %595 = vmatpush1.msra.mxu0 0.0
    %596 = vmatprep.subr.mxu0 0.0
    %597 = vmatpush1.msra.mxu0 0.0
    %598 = vmatprep.subr.mxu0 0.0
    %599 = vmatpush1.msra.mxu0 0.0
    %600 = vmatprep.subr.mxu0 0.0
    %601 = vmatpush1.msra.mxu0 0.0
    %602 = vmatprep.subr.mxu0 0.0
    %603 = vmatpush1.msra.mxu0 0.0
    %604 = vmatprep.subr.mxu0 0.0
    %605 = vmatpush1.msra.mxu0 0.0
    %606 = vmatprep.subr.mxu0 0.0
    %607 = vmatpush1.msra.mxu0 0.0
    %608 = vmatprep.subr.mxu0 0.0
    %609 = vmatpush1.msra.mxu0 0.0
    %610 = vmatprep.subr.mxu0 0.0
    %611 = vmatpush1.msra.mxu0 0.0
    %612 = vmatprep.subr.mxu0 0.0
    %613 = vmatpush1.msra.mxu0 0.0
    %614 = vmatprep.subr.mxu0 0.0
    %615 = vmatpush1.msra.mxu0 0.0
    %616 = vmatprep.subr.mxu0 0.0
    %617 = vmatpush1.msra.mxu0 0.0
    %618 = vmatprep.subr.mxu0 0.0
    %619 = vmatpush1.msra.mxu0 0.0
    %620 = vmatprep.subr.mxu0 0.0
    %621 = vmatpush1.msra.mxu0 0.0
    %622 = vmatprep.subr.mxu0 0.0
    %623 = vmatpush1.msra.mxu0 0.0
    %624 = vmatprep.subr.mxu0 0.0
    %625 = vmatpush1.msra.mxu0 0.0
    %626 = vmatprep.subr.mxu0 0.0
    %627 = vmatpush1.msra.mxu0 0.0
    %628 = vmatprep.subr.mxu0 0.0
    %629 = vmatpush1.msra.mxu0 0.0
    %630 = vmatprep.subr.mxu0 0.0
    %631 = vmatpush1.msra.mxu0 0.0
    %632 = vmatprep.subr.mxu0 0.0
    %633 = vmatpush1.msra.mxu0 0.0
    %634 = vmatprep.mubr.f32.mxu0 0.0
    %v635 = vand.u32 %v273, 4294901760
    %v636 = vsub.f32 %v273, %v635
    %637 = vmatmul.mubr.f32.gmra.mrb[0].mxu0 %v636
    %v638 = vpop.f32.mrb[0].mxu0
    %v639 = vadd.f32 %v521, %v638
    %v640 = vpop.f32.mrb[0].mxu0
    %641 = vmatprep.mubr.f32.mxu0 0.0
    %v642 = vand.u32 %v276, 4294901760
    %v643 = vsub.f32 %v276, %v642
    %644 = vmatmul.mubr.f32.gmra.mrb[0].mxu0 %v643
    %v645 = vpop.f32.mrb[0].mxu0
    %v646 = vadd.f32 %v527, %v645
    %v647 = vpop.f32.mrb[0].mxu0
    %648 = vmatprep.mubr.f32.mxu0 0.0
    %v649 = vand.u32 %v279, 4294901760
    %v650 = vsub.f32 %v279, %v649
    %651 = vmatmul.mubr.f32.gmra.mrb[0].mxu0 %v650
    %v652 = vpop.f32.mrb[0].mxu0
    %v653 = vadd.f32 %v533, %v652
    %v654 = vpop.f32.mrb[0].mxu0
    %655 = vmatprep.mubr.f32.mxu0 0.0
    %v656 = vand.u32 %v282, 4294901760
    %v657 = vsub.f32 %v282, %v656
    %658 = vmatmul.mubr.f32.gmra.mrb[0].mxu0 %v657
    %v659 = vpop.f32.mrb[0].mxu0
    %v660 = vadd.f32 %v539, %v659
    %v661 = vpop.f32.mrb[0].mxu0
    %662 = vmatprep.mubr.f32.mxu0 0.0
    %v663 = vand.u32 %v285, 4294901760
    %v664 = vsub.f32 %v285, %v663
    %665 = vmatmul.mubr.f32.gmra.mrb[0].mxu0 %v664
    %v666 = vpop.f32.mrb[0].mxu0
    %v667 = vadd.f32 %v545, %v666
    %v668 = vpop.f32.mrb[0].mxu0
    %669 = vmatprep.mubr.f32.mxu0 0.0
    %v670 = vand.u32 %v288, 4294901760
    %v671 = vsub.f32 %v288, %v670
    %672 = vmatmul.mubr.f32.gmra.mrb[0].mxu0 %v671
    %v673 = vpop.f32.mrb[0].mxu0
    %v674 = vadd.f32 %v551, %v673
    %v675 = vpop.f32.mrb[0].mxu0
    %676 = vmatprep.mubr.f32.mxu0 0.0
    %v677 = vand.u32 %v291, 4294901760
    %v678 = vsub.f32 %v291, %v677
    %679 = vmatmul.mubr.f32.gmra.mrb[0].mxu0 %v678
    %v680 = vpop.f32.mrb[0].mxu0
    %v681 = vadd.f32 %v557, %v680
    %v682 = vpop.f32.mrb[0].mxu0
    %683 = vmatprep.mubr.f32.mxu0 0.0
    %v684 = vand.u32 %v294, 4294901760
    %v685 = vsub.f32 %v294, %v684
    %686 = vmatmul.mubr.f32.gmra.mrb[0].mxu0 %v685
    %v687 = vpop.f32.mrb[0].mxu0
    %v688 = vadd.f32 %v563, %v687
    %v689 = vpop.f32.mrb[0].mxu0
    %690 = vdwg.mxu0
    %691 = vmatprep.subr.mxu0 0.0
    %v692 = vand.u32 %v269, 4294901760
    %693 = vmatpush1.msra.mxu0 %v692
    %694 = vmatprep.subr.mxu0 0.0
    %v695 = vand.u32 %v270, 4294901760
    %696 = vmatpush1.msra.mxu0 %v695
    %697 = vmatprep.subr.mxu0 0.0
    %698 = vmatpush1.msra.mxu0 0.0
    %699 = vmatprep.subr.mxu0 0.0
    %700 = vmatpush1.msra.mxu0 0.0
    %701 = vmatprep.subr.mxu0 0.0
    %702 = vmatpush1.msra.mxu0 0.0
    %703 = vmatprep.subr.mxu0 0.0
    %704 = vmatpush1.msra.mxu0 0.0
    %705 = vmatprep.subr.mxu0 0.0
    %706 = vmatpush1.msra.mxu0 0.0
    %707 = vmatprep.subr.mxu0 0.0
    %708 = vmatpush1.msra.mxu0 0.0
    %709 = vmatprep.subr.mxu0 0.0
    %710 = vmatpush1.msra.mxu0 0.0
    %711 = vmatprep.subr.mxu0 0.0
    %712 = vmatpush1.msra.mxu0 0.0
    %713 = vmatprep.subr.mxu0 0.0
    %714 = vmatpush1.msra.mxu0 0.0
    %715 = vmatprep.subr.mxu0 0.0
    %716 = vmatpush1.msra.mxu0 0.0
    %717 = vmatprep.subr.mxu0 0.0
    %718 = vmatpush1.msra.mxu0 0.0
    %719 = vmatprep.subr.mxu0 0.0
    %720 = vmatpush1.msra.mxu0 0.0
    %721 = vmatprep.subr.mxu0 0.0
    %722 = vmatpush1.msra.mxu0 0.0
    %723 = vmatprep.subr.mxu0 0.0
    %724 = vmatpush1.msra.mxu0 0.0
    %725 = vmatprep.subr.mxu0 0.0
    %726 = vmatpush1.msra.mxu0 0.0
    %727 = vmatprep.subr.mxu0 0.0
    %728 = vmatpush1.msra.mxu0 0.0
    %729 = vmatprep.subr.mxu0 0.0
    %730 = vmatpush1.msra.mxu0 0.0
    %731 = vmatprep.subr.mxu0 0.0
    %732 = vmatpush1.msra.mxu0 0.0
    %733 = vmatprep.subr.mxu0 0.0
    %734 = vmatpush1.msra.mxu0 0.0
    %735 = vmatprep.subr.mxu0 0.0
    %736 = vmatpush1.msra.mxu0 0.0
    %737 = vmatprep.subr.mxu0 0.0
    %738 = vmatpush1.msra.mxu0 0.0
    %739 = vmatprep.subr.mxu0 0.0
    %740 = vmatpush1.msra.mxu0 0.0
    %741 = vmatprep.subr.mxu0 0.0
    %742 = vmatpush1.msra.mxu0 0.0
    %743 = vmatprep.subr.mxu0 0.0
    %744 = vmatpush1.msra.mxu0 0.0
    %745 = vmatprep.subr.mxu0 0.0
    %746 = vmatpush1.msra.mxu0 0.0
    %747 = vmatprep.subr.mxu0 0.0
    %748 = vmatpush1.msra.mxu0 0.0
    %749 = vmatprep.subr.mxu0 0.0
    %750 = vmatpush1.msra.mxu0 0.0
    %751 = vmatprep.subr.mxu0 0.0
    %752 = vmatpush1.msra.mxu0 0.0
    %753 = vmatprep.subr.mxu0 0.0
    %754 = vmatpush1.msra.mxu0 0.0
    %755 = vmatprep.subr.mxu0 0.0
    %756 = vmatpush1.msra.mxu0 0.0
    %757 = vmatprep.mubr.f32.mxu0 0.0
    %v758 = vand.u32 %v273, 4294901760
    %v759 = vsub.f32 %v273, %v758
    %v760 = vand.u32 %v759, 4294901760
    %761 = vmatmul.mubr.f32.gmra.mrb[0].mxu0 %v760
    %v762 = vpop.f32.mrb[0].mxu0
    %v763 = vadd.f32 %v639, %v762
    %v764 = vpop.f32.mrb[0].mxu0
    %765 = vmatprep.mubr.f32.mxu0 0.0
    %v766 = vand.u32 %v276, 4294901760
    %v767 = vsub.f32 %v276, %v766
    %v768 = vand.u32 %v767, 4294901760
    %769 = vmatmul.mubr.f32.gmra.mrb[0].mxu0 %v768
    %v770 = vpop.f32.mrb[0].mxu0
    %v771 = vadd.f32 %v646, %v770
    %v772 = vpop.f32.mrb[0].mxu0
    %773 = vmatprep.mubr.f32.mxu0 0.0
    %v774 = vand.u32 %v279, 4294901760
    %v775 = vsub.f32 %v279, %v774
    %v776 = vand.u32 %v775, 4294901760
    %777 = vmatmul.mubr.f32.gmra.mrb[0].mxu0 %v776
    %v778 = vpop.f32.mrb[0].mxu0
    %v779 = vadd.f32 %v653, %v778
    %v780 = vpop.f32.mrb[0].mxu0
    %781 = vmatprep.mubr.f32.mxu0 0.0
    %v782 = vand.u32 %v282, 4294901760
    %v783 = vsub.f32 %v282, %v782
    %v784 = vand.u32 %v783, 4294901760
    %785 = vmatmul.mubr.f32.gmra.mrb[0].mxu0 %v784
    %v786 = vpop.f32.mrb[0].mxu0
    %v787 = vadd.f32 %v660, %v786
    %v788 = vpop.f32.mrb[0].mxu0
    %789 = vmatprep.mubr.f32.mxu0 0.0
    %v790 = vand.u32 %v285, 4294901760
    %v791 = vsub.f32 %v285, %v790
    %v792 = vand.u32 %v791, 4294901760
    %793 = vmatmul.mubr.f32.gmra.mrb[0].mxu0 %v792
    %v794 = vpop.f32.mrb[0].mxu0
    %v795 = vadd.f32 %v667, %v794
    %v796 = vpop.f32.mrb[0].mxu0
    %797 = vmatprep.mubr.f32.mxu0 0.0
    %v798 = vand.u32 %v288, 4294901760
    %v799 = vsub.f32 %v288, %v798
    %v800 = vand.u32 %v799, 4294901760
    %801 = vmatmul.mubr.f32.gmra.mrb[0].mxu0 %v800
    %v802 = vpop.f32.mrb[0].mxu0
    %v803 = vadd.f32 %v674, %v802
    %v804 = vpop.f32.mrb[0].mxu0
    %805 = vmatprep.mubr.f32.mxu0 0.0
    %v806 = vand.u32 %v291, 4294901760
    %v807 = vsub.f32 %v291, %v806
    %v808 = vand.u32 %v807, 4294901760
    %809 = vmatmul.mubr.f32.gmra.mrb[0].mxu0 %v808
    %v810 = vpop.f32.mrb[0].mxu0
    %v811 = vadd.f32 %v681, %v810
    %v812 = vpop.f32.mrb[0].mxu0
    %813 = vmatprep.mubr.f32.mxu0 0.0
    %v814 = vand.u32 %v294, 4294901760
    %v815 = vsub.f32 %v294, %v814
    %v816 = vand.u32 %v815, 4294901760
    %817 = vmatmul.mubr.f32.gmra.mrb[0].mxu0 %v816
    %v818 = vpop.f32.mrb[0].mxu0
    %v819 = vadd.f32 %v688, %v818
    %v820 = vpop.f32.mrb[0].mxu0
    %821 = vdwg.mxu0
    %822 = vmatprep.subr.mxu0 0.0
    %v823 = vand.u32 %v269, 4294901760
    %v824 = vsub.f32 %v269, %v823
    %v825 = vand.u32 %v824, 4294901760
    %826 = vmatpush1.msra.mxu0 %v825
    %827 = vmatprep.subr.mxu0 0.0
    %v828 = vand.u32 %v270, 4294901760
    %v829 = vsub.f32 %v270, %v828
    %v830 = vand.u32 %v829, 4294901760
    %831 = vmatpush1.msra.mxu0 %v830
    %832 = vmatprep.subr.mxu0 0.0
    %833 = vmatpush1.msra.mxu0 0.0
    %834 = vmatprep.subr.mxu0 0.0
    %835 = vmatpush1.msra.mxu0 0.0
    %836 = vmatprep.subr.mxu0 0.0
    %837 = vmatpush1.msra.mxu0 0.0
    %838 = vmatprep.subr.mxu0 0.0
    %839 = vmatpush1.msra.mxu0 0.0
    %840 = vmatprep.subr.mxu0 0.0
    %841 = vmatpush1.msra.mxu0 0.0
    %842 = vmatprep.subr.mxu0 0.0
    %843 = vmatpush1.msra.mxu0 0.0
    %844 = vmatprep.subr.mxu0 0.0
    %845 = vmatpush1.msra.mxu0 0.0
    %846 = vmatprep.subr.mxu0 0.0
    %847 = vmatpush1.msra.mxu0 0.0
    %848 = vmatprep.subr.mxu0 0.0
    %849 = vmatpush1.msra.mxu0 0.0
    %850 = vmatprep.subr.mxu0 0.0
    %851 = vmatpush1.msra.mxu0 0.0
    %852 = vmatprep.subr.mxu0 0.0
    %853 = vmatpush1.msra.mxu0 0.0
    %854 = vmatprep.subr.mxu0 0.0
    %855 = vmatpush1.msra.mxu0 0.0
    %856 = vmatprep.subr.mxu0 0.0
    %857 = vmatpush1.msra.mxu0 0.0
    %858 = vmatprep.subr.mxu0 0.0
    %859 = vmatpush1.msra.mxu0 0.0
    %860 = vmatprep.subr.mxu0 0.0
    %861 = vmatpush1.msra.mxu0 0.0
    %862 = vmatprep.subr.mxu0 0.0
    %863 = vmatpush1.msra.mxu0 0.0
    %864 = vmatprep.subr.mxu0 0.0
    %865 = vmatpush1.msra.mxu0 0.0
    %866 = vmatprep.subr.mxu0 0.0
    %867 = vmatpush1.msra.mxu0 0.0
    %868 = vmatprep.subr.mxu0 0.0
    %869 = vmatpush1.msra.mxu0 0.0
    %870 = vmatprep.subr.mxu0 0.0
    %871 = vmatpush1.msra.mxu0 0.0
    %872 = vmatprep.subr.mxu0 0.0
    %873 = vmatpush1.msra.mxu0 0.0
    %874 = vmatprep.subr.mxu0 0.0
    %875 = vmatpush1.msra.mxu0 0.0
    %876 = vmatprep.subr.mxu0 0.0
    %877 = vmatpush1.msra.mxu0 0.0
    %878 = vmatprep.subr.mxu0 0.0
    %879 = vmatpush1.msra.mxu0 0.0
    %880 = vmatprep.subr.mxu0 0.0
    %881 = vmatpush1.msra.mxu0 0.0
    %882 = vmatprep.subr.mxu0 0.0
    %883 = vmatpush1.msra.mxu0 0.0
    %884 = vmatprep.subr.mxu0 0.0
    %885 = vmatpush1.msra.mxu0 0.0
    %886 = vmatprep.subr.mxu0 0.0
    %887 = vmatpush1.msra.mxu0 0.0
    %888 = vmatprep.subr.mxu0 0.0
    %889 = vmatpush1.msra.mxu0 0.0
    %890 = vmatprep.subr.mxu0 0.0
    %891 = vmatpush1.msra.mxu0 0.0
    %892 = vmatprep.mubr.f32.mxu0 0.0
    %v893 = vand.u32 %v273, 4294901760
    %894 = vmatmul.mubr.f32.gmra.mrb[0].mxu0 %v893
    %v895 = vpop.f32.mrb[0].mxu0
    %v896 = vadd.f32 %v763, %v895
    %v897 = vpop.f32.mrb[0].mxu0
    %898 = vmatprep.mubr.f32.mxu0 0.0
    %v899 = vand.u32 %v276, 4294901760
    %900 = vmatmul.mubr.f32.gmra.mrb[0].mxu0 %v899
    %v901 = vpop.f32.mrb[0].mxu0
    %v902 = vadd.f32 %v771, %v901
    %v903 = vpop.f32.mrb[0].mxu0
    %904 = vmatprep.mubr.f32.mxu0 0.0
    %v905 = vand.u32 %v279, 4294901760
    %906 = vmatmul.mubr.f32.gmra.mrb[0].mxu0 %v905
    %v907 = vpop.f32.mrb[0].mxu0
    %v908 = vadd.f32 %v779, %v907
    %v909 = vpop.f32.mrb[0].mxu0
    %910 = vmatprep.mubr.f32.mxu0 0.0
    %v911 = vand.u32 %v282, 4294901760
    %912 = vmatmul.mubr.f32.gmra.mrb[0].mxu0 %v911
    %v913 = vpop.f32.mrb[0].mxu0
    %v914 = vadd.f32 %v787, %v913
    %v915 = vpop.f32.mrb[0].mxu0
    %916 = vmatprep.mubr.f32.mxu0 0.0
    %v917 = vand.u32 %v285, 4294901760
    %918 = vmatmul.mubr.f32.gmra.mrb[0].mxu0 %v917
    %v919 = vpop.f32.mrb[0].mxu0
    %v920 = vadd.f32 %v795, %v919
    %v921 = vpop.f32.mrb[0].mxu0
    %922 = vmatprep.mubr.f32.mxu0 0.0
    %v923 = vand.u32 %v288, 4294901760
    %924 = vmatmul.mubr.f32.gmra.mrb[0].mxu0 %v923
    %v925 = vpop.f32.mrb[0].mxu0
    %v926 = vadd.f32 %v803, %v925
    %v927 = vpop.f32.mrb[0].mxu0
    %928 = vmatprep.mubr.f32.mxu0 0.0
    %v929 = vand.u32 %v291, 4294901760
    %930 = vmatmul.mubr.f32.gmra.mrb[0].mxu0 %v929
    %v931 = vpop.f32.mrb[0].mxu0
    %v932 = vadd.f32 %v811, %v931
    %v933 = vpop.f32.mrb[0].mxu0
    %934 = vmatprep.mubr.f32.mxu0 0.0
    %v935 = vand.u32 %v294, 4294901760
    %936 = vmatmul.mubr.f32.gmra.mrb[0].mxu0 %v935
    %v937 = vpop.f32.mrb[0].mxu0
    %v938 = vadd.f32 %v819, %v937
    %v939 = vpop.f32.mrb[0].mxu0
    %940 = vdwg.mxu0
    %941 = vmatprep.subr.mxu0 0.0
    %v942 = vand.u32 %v269, 4294901760
    %943 = vmatpush1.msra.mxu0 %v942
    %944 = vmatprep.subr.mxu0 0.0
    %v945 = vand.u32 %v270, 4294901760
    %946 = vmatpush1.msra.mxu0 %v945
    %947 = vmatprep.subr.mxu0 0.0
    %948 = vmatpush1.msra.mxu0 0.0
    %949 = vmatprep.subr.mxu0 0.0
    %950 = vmatpush1.msra.mxu0 0.0
    %951 = vmatprep.subr.mxu0 0.0
    %952 = vmatpush1.msra.mxu0 0.0
    %953 = vmatprep.subr.mxu0 0.0
    %954 = vmatpush1.msra.mxu0 0.0
    %955 = vmatprep.subr.mxu0 0.0
    %956 = vmatpush1.msra.mxu0 0.0
    %957 = vmatprep.subr.mxu0 0.0
    %958 = vmatpush1.msra.mxu0 0.0
    %959 = vmatprep.subr.mxu0 0.0
    %960 = vmatpush1.msra.mxu0 0.0
    %961 = vmatprep.subr.mxu0 0.0
    %962 = vmatpush1.msra.mxu0 0.0
    %963 = vmatprep.subr.mxu0 0.0
    %964 = vmatpush1.msra.mxu0 0.0
    %965 = vmatprep.subr.mxu0 0.0
    %966 = vmatpush1.msra.mxu0 0.0
    %967 = vmatprep.subr.mxu0 0.0
    %968 = vmatpush1.msra.mxu0 0.0
    %969 = vmatprep.subr.mxu0 0.0
    %970 = vmatpush1.msra.mxu0 0.0
    %971 = vmatprep.subr.mxu0 0.0
    %972 = vmatpush1.msra.mxu0 0.0
    %973 = vmatprep.subr.mxu0 0.0
    %974 = vmatpush1.msra.mxu0 0.0
    %975 = vmatprep.subr.mxu0 0.0
    %976 = vmatpush1.msra.mxu0 0.0
    %977 = vmatprep.subr.mxu0 0.0
    %978 = vmatpush1.msra.mxu0 0.0
    %979 = vmatprep.subr.mxu0 0.0
    %980 = vmatpush1.msra.mxu0 0.0
    %981 = vmatprep.subr.mxu0 0.0
    %982 = vmatpush1.msra.mxu0 0.0
    %983 = vmatprep.subr.mxu0 0.0
    %984 = vmatpush1.msra.mxu0 0.0
    %985 = vmatprep.subr.mxu0 0.0
    %986 = vmatpush1.msra.mxu0 0.0
    %987 = vmatprep.subr.mxu0 0.0
    %988 = vmatpush1.msra.mxu0 0.0
    %989 = vmatprep.subr.mxu0 0.0
    %990 = vmatpush1.msra.mxu0 0.0
    %991 = vmatprep.subr.mxu0 0.0
    %992 = vmatpush1.msra.mxu0 0.0
    %993 = vmatprep.subr.mxu0 0.0
    %994 = vmatpush1.msra.mxu0 0.0
    %995 = vmatprep.subr.mxu0 0.0
    %996 = vmatpush1.msra.mxu0 0.0
    %997 = vmatprep.subr.mxu0 0.0
    %998 = vmatpush1.msra.mxu0 0.0
    %999 = vmatprep.subr.mxu0 0.0
    %1000 = vmatpush1.msra.mxu0 0.0
    %1001 = vmatprep.subr.mxu0 0.0
    %1002 = vmatpush1.msra.mxu0 0.0
    %1003 = vmatprep.subr.mxu0 0.0
    %1004 = vmatpush1.msra.mxu0 0.0
    %1005 = vmatprep.subr.mxu0 0.0
    %1006 = vmatpush1.msra.mxu0 0.0
    %1007 = vmatprep.mubr.f32.mxu0 0.0
    %v1008 = vand.u32 %v273, 4294901760
    %1009 = vmatmul.mubr.f32.gmra.mrb[0].mxu0 %v1008
    %v1010 = vpop.f32.mrb[0].mxu0
    %v1011 = vadd.f32 %v896, %v1010
    %v1012 = vpop.f32.mrb[0].mxu0
    %1013 = vmatprep.mubr.f32.mxu0 0.0
    %v1014 = vand.u32 %v276, 4294901760
    %1015 = vmatmul.mubr.f32.gmra.mrb[0].mxu0 %v1014
    %v1016 = vpop.f32.mrb[0].mxu0
    %v1017 = vadd.f32 %v902, %v1016
    %v1018 = vpop.f32.mrb[0].mxu0
    %1019 = vmatprep.mubr.f32.mxu0 0.0
    %v1020 = vand.u32 %v279, 4294901760
    %1021 = vmatmul.mubr.f32.gmra.mrb[0].mxu0 %v1020
    %v1022 = vpop.f32.mrb[0].mxu0
    %v1023 = vadd.f32 %v908, %v1022
    %v1024 = vpop.f32.mrb[0].mxu0
    %1025 = vmatprep.mubr.f32.mxu0 0.0
    %v1026 = vand.u32 %v282, 4294901760
    %1027 = vmatmul.mubr.f32.gmra.mrb[0].mxu0 %v1026
    %v1028 = vpop.f32.mrb[0].mxu0
    %v1029 = vadd.f32 %v914, %v1028
    %v1030 = vpop.f32.mrb[0].mxu0
    %1031 = vmatprep.mubr.f32.mxu0 0.0
    %v1032 = vand.u32 %v285, 4294901760
    %1033 = vmatmul.mubr.f32.gmra.mrb[0].mxu0 %v1032
    %v1034 = vpop.f32.mrb[0].mxu0
    %v1035 = vadd.f32 %v920, %v1034
    %v1036 = vpop.f32.mrb[0].mxu0
    %1037 = vmatprep.mubr.f32.mxu0 0.0
    %v1038 = vand.u32 %v288, 4294901760
    %1039 = vmatmul.mubr.f32.gmra.mrb[0].mxu0 %v1038
    %v1040 = vpop.f32.mrb[0].mxu0
    %v1041 = vadd.f32 %v926, %v1040
    %v1042 = vpop.f32.mrb[0].mxu0
    %1043 = vmatprep.mubr.f32.mxu0 0.0
    %v1044 = vand.u32 %v291, 4294901760
    %1045 = vmatmul.mubr.f32.gmra.mrb[0].mxu0 %v1044
    %v1046 = vpop.f32.mrb[0].mxu0
    %v1047 = vadd.f32 %v932, %v1046
    %v1048 = vpop.f32.mrb[0].mxu0
    %1049 = vmatprep.mubr.f32.mxu0 0.0
    %v1050 = vand.u32 %v294, 4294901760
    %1051 = vmatmul.mubr.f32.gmra.mrb[0].mxu0 %v1050
    %v1052 = vpop.f32.mrb[0].mxu0
    %v1053 = vadd.f32 %v938, %v1052
    %v1054 = vpop.f32.mrb[0].mxu0
    %1055 = vdwg.mxu0
    %vm1056 = vcmask 64512
    %1057 = vst.msk [vmem:[#allocation2] sm:$0xff] %vm1056, %v1011
    %1058 = vst.msk [vmem:[#allocation2 + $0x8] sm:$0xff] %vm1056, %v1017
    %1059 = vst.msk [vmem:[#allocation2 + $0x10] sm:$0xff] %vm1056, %v1023
    %1060 = vst.msk [vmem:[#allocation2 + $0x18] sm:$0xff] %vm1056, %v1029
    %1061 = vst.msk [vmem:[#allocation2 + $0x20] sm:$0xff] %vm1056, %v1035
    %1062 = vst.msk [vmem:[#allocation2 + $0x28] sm:$0xff] %vm1056, %v1041
    %1063 = vst.msk [vmem:[#allocation2 + $0x30] sm:$0xff] %vm1056, %v1047
    %1064 = vst.msk [vmem:[#allocation2 + $0x38] sm:$0xff] %vm1056, %v1053
    // Predicated region
    $region10: #{_pool_forward.1} parent=1 // pred_check
      _
    $region11: #{_pool_forward.1} parent=1 // pred_check_branch
      %1066 = sbr.rel (0) target = $region13
    $region12: #{_pool_forward.1} parent=1 // pred_region
      %s1068 = ssub.s32 1024, 1024
      %1069 = vsyncadd [#allocation3], %s1068
      %s1070 = sshll.u32 [#allocation2], 4
      %s1071 = int_to_ptr.vmem [resolvable:$true] %s1070
      %1076 = dma.vmem_to_hbm [thread:$0]  %s1071, 1024, %s2, [#allocation3], 128, 128, 8
    $region13: #{_pool_forward.1} parent=1 // pred_fallthru
      _
    // Predicated region
    $region14: #{_pool_forward.1} parent=1 // pred_check
      _
    $region15: #{_pool_forward.1} parent=1 // pred_check_branch
      %1078 = sbr.rel (0) target = $region17
    $region16: #{_pool_forward.1} parent=1 // pred_region
      %1079 = dma.done [#allocation3], 1024
    $region17: #{_pool_forward.1} parent=1 // pred_fallthru
      _
    %1080 = vsyncpa [#allocation3], 1

</llo_original>
